<compile_context>
chip_gen: v5e
topology: v5e:2x2
jax: 0.10.0
libtpu: 0.0.40
codegen_flags: <defaults>
</compile_context>

<pallas_src>
import numpy as np
import jax
import jax.numpy as jnp
from jax.experimental import pallas as pl
from jax.experimental.pallas import tpu as pltpu

BN_EPS = 1e-5


def _vmem_limit_bytes():
    # Generation-aware scoped-VMEM budget: ~3/4 of physical (96 MiB on v5e/v6e, 48 MiB on v7x).
    try:
        cap = int(pltpu.get_tpu_info().vmem_capacity_bytes)
    except Exception:
        cap = 64 * 1024 * 1024
    return min((cap * 3) // 4, 96 * 1024 * 1024)


def _deconv_tile(x, w, oc):
    """x: (IC, L) bf16, w: (3*OC, IC) bf16 = [W1^T; W2^T; W0^T]. Returns f32 (y_even, y_odd).

    ConvTranspose1d(ks=3, s=2, pad=1, out_pad=1):
      y[:, 2j]   = W1^T x[:, j]
      y[:, 2j+1] = W2^T x[:, j] + W0^T x[:, j+1]   (x[:, L] treated as 0)
    """
    z = jnp.dot(w, x, preferred_element_type=jnp.float32)          # (3*OC, L), f32 accum
    y_even = z[:oc, :]                                              # W1^T x
    p0 = z[2 * oc:, :]                                              # W0^T x
    # Shift the small (OC, L) product one step left (zero at the end) instead of shifting x.
    p0s = jnp.concatenate([p0[:, 1:], jnp.zeros((oc, 1), jnp.float32)], axis=-1)
    y_odd = z[oc:2 * oc, :] + p0s                                   # W2^T x + W0^T x_shift
    return y_even, y_odd


def stats_kernel(x_ref, w_ref, stats_ref):
    # x_ref: (1, IC, L) bf16; w_ref: (3*OC, IC) bf16; stats_ref: (OC, 2) f32 accumulator
    # stats_ref[:, 0] = sum over batch & time of y; stats_ref[:, 1] = sum of y^2.
    @pl.when(pl.program_id(0) == 0)
    def _():
        stats_ref[...] = jnp.zeros_like(stats_ref)

    oc = stats_ref.shape[0]
    y_even, y_odd = _deconv_tile(x_ref[0], w_ref[...], oc)
    s1 = (jnp.sum(y_even, axis=-1, keepdims=True)
          + jnp.sum(y_odd, axis=-1, keepdims=True))                 # (OC, 1)
    s2 = (jnp.sum(y_even * y_even, axis=-1, keepdims=True)
          + jnp.sum(y_odd * y_odd, axis=-1, keepdims=True))         # (OC, 1)
    stats_ref[...] += jnp.concatenate([s1, s2], axis=-1)


def _bn_relu(y_even, y_odd, scale, shift):
    z_even = jnp.maximum(y_even * scale + shift, 0.0)
    z_odd = jnp.maximum(y_odd * scale + shift, 0.0)
    return z_even, z_odd


def apply_kernel_fused(x_ref, w_ref, scale_ref, shift_ref, out_ref):
    # out_ref: (1, OC, 2L) f32 -- even/odd time steps interleaved in-VMEM (lane-dense store).
    oc = out_ref.shape[1]
    L = x_ref.shape[2]
    y_even, y_odd = _deconv_tile(x_ref[0], w_ref[...], oc)
    z_even, z_odd = _bn_relu(y_even, y_odd, scale_ref[...], shift_ref[...])
    out = jnp.stack([z_even, z_odd], axis=-1).reshape(oc, 2 * L)
    out_ref[0] = out.astype(out_ref.dtype)


def apply_kernel_split(x_ref, w_ref, scale_ref, shift_ref, out_ref):
    # Fallback: out_ref (1, 2, OC, L); parity axis is interleaved into time on the host.
    oc = out_ref.shape[2]
    y_even, y_odd = _deconv_tile(x_ref[0], w_ref[...], oc)
    z_even, z_odd = _bn_relu(y_even, y_odd, scale_ref[...], shift_ref[...])
    out_ref[0, 0] = z_even.astype(out_ref.dtype)
    out_ref[0, 1] = z_odd.astype(out_ref.dtype)


def deconv_block_forward(x_ncl, W, b, gamma, beta):
    """x_ncl: (N, IC, L) f32, W: (IC, OC, 3) ConvTranspose1d weight, b/gamma/beta: (OC,).
    Returns (N, OC, 2*L) f32 in PyTorch NCL layout (training-mode BatchNorm)."""
    N, IC, L = x_ncl.shape
    OC = W.shape[1]
    del b  # per-channel conv bias is cancelled exactly by training-mode BatchNorm mean-subtract

    x_bf = x_ncl.astype(jnp.bfloat16)
    # Fused weight for one MXU push per tile: [W1^T; W2^T; W0^T]  -> (3*OC, IC), bf16 operands.
    W3 = jnp.concatenate([W[:, :, 1].T, W[:, :, 2].T, W[:, :, 0].T],
                         axis=0).astype(jnp.bfloat16)

    vlim = _vmem_limit_bytes()

    # ---- Pass 1: per-channel BN statistics, accumulated in-kernel across the batch grid. ----
    stats = pl.pallas_call(
        stats_kernel,
        out_shape=jax.ShapeDtypeStruct((OC, 2), jnp.float32),
        grid_spec=pltpu.PrefetchScalarGridSpec(
            num_scalar_prefetch=0,
            grid=(N,),
            in_specs=[pl.BlockSpec((1, IC, L), lambda n: (n, 0, 0)),
                      pl.BlockSpec((3 * OC, IC), lambda n: (0, 0))],
            out_specs=pl.BlockSpec((OC, 2), lambda n: (0, 0))),
        compiler_params=pltpu.CompilerParams(dimension_semantics=("arbitrary",),
                                             vmem_limit_bytes=vlim),
    )(x_bf, W3)

    # Tiny host-side fold of the statistics into BN scale/shift (f32, clamped variance).
    cnt = jnp.float32(N * 2 * L)
    mean = stats[:, 0] / cnt
    var = jnp.maximum(stats[:, 1] / cnt - mean * mean, 0.0)
    inv = jax.lax.rsqrt(var + BN_EPS)
    scale = (gamma.astype(jnp.float32) * inv).reshape(OC, 1)
    shift = (beta.astype(jnp.float32) - mean * gamma.astype(jnp.float32) * inv).reshape(OC, 1)

    # ---- Pass 2: recompute conv (bf16 MXU, f32 accum), folded BN + ReLU, write NCL output. ----
    cparams2 = pltpu.CompilerParams(dimension_semantics=("parallel",), vmem_limit_bytes=vlim)
    in_specs2 = [pl.BlockSpec((1, IC, L), lambda n: (n, 0, 0)),
                 pl.BlockSpec((3 * OC, IC), lambda n: (0, 0)),
                 pl.BlockSpec((OC, 1), lambda n: (0, 0)),
                 pl.BlockSpec((OC, 1), lambda n: (0, 0))]
    args = (x_bf, W3, scale, shift)

    # Preferred path: interleave even/odd time steps inside the kernel -> single lane-dense
    # (N, OC, 2L) output, no external transpose pass.  If this Mosaic build cannot lower the
    # in-VMEM lane interleave, fall back to the validated split layout + host interleave.
    try:
        out = pl.pallas_call(
            apply_kernel_fused,
            out_shape=jax.ShapeDtypeStruct((N, OC, 2 * L), jnp.float32),
            grid_spec=pltpu.PrefetchScalarGridSpec(
                num_scalar_prefetch=0, grid=(N,),
                in_specs=in_specs2,
                out_specs=pl.BlockSpec((1, OC, 2 * L), lambda n: (n, 0, 0))),
            compiler_params=cparams2,
        )(*args)
        return jax.block_until_ready(out)     # surface lowering/runtime errors inside the try
    except Exception:
        pass

    out4 = pl.pallas_call(
        apply_kernel_split,
        out_shape=jax.ShapeDtypeStruct((N, 2, OC, L), jnp.float32),
        grid_spec=pltpu.PrefetchScalarGridSpec(
            num_scalar_prefetch=0, grid=(N,),
            in_specs=in_specs2,
            out_specs=pl.BlockSpec((1, 2, OC, L), lambda n: (n, 0, 0, 0))),
        compiler_params=cparams2,
    )(*args)
    # (N, 2, OC, L) -> (N, OC, L, 2) -> (N, OC, 2L): interleave even/odd time steps.
    return jnp.transpose(out4, (0, 2, 3, 1)).reshape(N, OC, 2 * L)


def reference_forward(x_ncl, W, b, gamma, beta, eps=BN_EPS, stride=2, pad=1, out_pad=1):
    """Naive numpy reference of ConvTranspose1d + BatchNorm1d(train) + ReLU."""
    x_ncl = np.asarray(x_ncl, np.float64)
    W = np.asarray(W, np.float64)
    N, IC, L = x_ncl.shape
    OC, ks = W.shape[1], W.shape[2]
    Lout = (L - 1) * stride - 2 * pad + ks + out_pad
    y = np.zeros((N, OC, Lout), np.float64)
    for n in range(N):
        for ic in range(IC):
            for i in range(L):
                for k in range(ks):
                    t = i * stride - pad + k
                    if 0 <= t < Lout:
                        y[n, :, t] += x_ncl[n, ic, i] * W[ic, :, k]
    y += np.asarray(b, np.float64)[None, :, None]
    mean = y.mean(axis=(0, 2), keepdims=True)
    var = y.var(axis=(0, 2), keepdims=True)
    yn = (y - mean) / np.sqrt(var + eps)
    out = yn * np.asarray(gamma)[None, :, None] + np.asarray(beta)[None, :, None]
    return np.maximum(out, 0.0)


if __name__ == "__main__":
    N, IC, OC, L = 2, 4, 8, 16

    key = jax.random.PRNGKey(0)
    kx, kw, kb, kg, kbe = jax.random.split(key, 5)
    x = jax.random.normal(kx, (N, IC, L), jnp.float32)
    W = jax.random.normal(kw, (IC, OC, 3), jnp.float32) * 0.1      # ConvTranspose1d weight (ic, oc, ks)
    b = jax.random.normal(kb, (OC,), jnp.float32) * 0.1            # ConvTranspose1d bias
    gamma = 1.0 + 0.1 * jax.random.normal(kg, (OC,), jnp.float32)  # BatchNorm1d weight
    beta = 0.1 * jax.random.normal(kbe, (OC,), jnp.float32)        # BatchNorm1d bias

    out = jax.block_until_ready(deconv_block_forward(x, W, b, gamma, beta))
    assert out.shape == (N, OC, 2 * L)

    # Reference uses the same bf16-quantized operands the kernel feeds the MXU (accumulation
    # and BN math stay f32 in the kernel), so the comparison isolates implementation error.
    x_q = np.asarray(x.astype(jnp.bfloat16).astype(jnp.float32))
    W_q = np.asarray(W.astype(jnp.bfloat16).astype(jnp.float32))
    ref = reference_forward(x_q, W_q, np.asarray(b), np.asarray(gamma), np.asarray(beta))
    np.testing.assert_allclose(np.asarray(out), ref, rtol=5e-4, atol=5e-4)

    print("KERNEL_OK")
</pallas_src>

<mosaic_0001>
module attributes {stable_mosaic.version = 11 : i64} {
  func.func @stats_kernel(%arg0: i32, %arg1: memref<1x4x16xbf16, #tpu.memory_space<vmem>>, %arg2: memref<24x4xbf16, #tpu.memory_space<vmem>>, %arg3: memref<8x2xf32, #tpu.memory_space<vmem>>) attributes {dimension_semantics = [#tpu.dimension_semantics<arbitrary>], iteration_bounds = array<i64: 2>, scalar_prefetch = 0 : i64, scratch_operands = 0 : i64, tpu.core_type = #tpu.core_type<tc>, window_params = [{transform_indices = @transform_0, window_bounds = array<i64: 1, 4, 16>}, {pipeline_mode = #tpu.pipeline_mode<synchronous>, transform_indices = @transform_1, window_bounds = array<i64: 24, 4>}, {pipeline_mode = #tpu.pipeline_mode<synchronous>, transform_indices = @transform_2, window_bounds = array<i64: 8, 2>}]} {
    %c0_i32 = arith.constant 0 : i32
    %0 = arith.cmpi eq, %arg0, %c0_i32 : i32
    %1 = arith.extui %0 : i1 to i32
    %c0_i32_0 = arith.constant 0 : i32
    %2 = arith.cmpi ne, %1, %c0_i32_0 : i32
    scf.if %2 {
      %cst_14 = arith.constant 0.000000e+00 : f32
      %30 = vector.broadcast %cst_14 : f32 to vector<8x2xf32>
      %c0_15 = arith.constant 0 : index
      %c0_16 = arith.constant 0 : index
      %31 = vector.load %arg3[%c0_15, %c0_16] : memref<8x2xf32, #tpu.memory_space<vmem>>, vector<8x2xf32>
      tpu.vector_store %arg3[%c0_15, %c0_16], %30 {strides = array<i32>} : memref<8x2xf32, #tpu.memory_space<vmem>>, vector<8x2xf32>,
    } else {
    }
    %c0 = arith.constant 0 : index
    %c0_1 = arith.constant 0 : index
    %c0_2 = arith.constant 0 : index
    %3 = vector.load %arg1[%c0, %c0_1, %c0_2] : memref<1x4x16xbf16, #tpu.memory_space<vmem>>, vector<1x4x16xbf16>
    %4 = vector.shape_cast %3 : vector<1x4x16xbf16> to vector<4x16xbf16>
    %c0_3 = arith.constant 0 : index
    %c0_4 = arith.constant 0 : index
    %5 = vector.load %arg2[%c0_3, %c0_4] : memref<24x4xbf16, #tpu.memory_space<vmem>>, vector<24x4xbf16>
    %cst = arith.constant dense<0.000000e+00> : vector<24x16xf32>
    %6 = tpu.matmul %5, %4, %cst {dimension_numbers = #tpu.dot_dimension_numbers<[1], [0], [0], [1], [0, 0, 1, 1], [], []>} : vector<24x4xbf16>, vector<4x16xbf16>, vector<24x16xf32> -> vector<24x16xf32>
    %7 = vector.extract_strided_slice %6 {offsets = [0, 0], sizes = [8, 16], strides = [1, 1]} : vector<24x16xf32> to vector<8x16xf32>
    %8 = vector.extract_strided_slice %6 {offsets = [16, 0], sizes = [8, 16], strides = [1, 1]} : vector<24x16xf32> to vector<8x16xf32>
    %9 = vector.extract_strided_slice %8 {offsets = [0, 1], sizes = [8, 15], strides = [1, 1]} : vector<8x16xf32> to vector<8x15xf32>
    %cst_5 = arith.constant 0.000000e+00 : f32
    %10 = vector.broadcast %cst_5 : f32 to vector<8x1xf32>
    %11 = tpu.concatenate %9, %10 in 1 : vector<8x15xf32>, vector<8x1xf32> -> vector<8x16xf32>
    %12 = vector.extract_strided_slice %6 {offsets = [8, 0], sizes = [8, 16], strides = [1, 1]} : vector<24x16xf32> to vector<8x16xf32>
    %13 = arith.addf %12, %11 : vector<8x16xf32>
    %cst_6 = arith.constant dense<0.000000e+00> : vector<8xf32>
    %14 = vector.multi_reduction <add>, %7, %cst_6 [1] : vector<8x16xf32> to vector<8xf32>
    %15 = vector.shape_cast %14 : vector<8xf32> to vector<8x1xf32>
    %cst_7 = arith.constant dense<0.000000e+00> : vector<8xf32>
    %16 = vector.multi_reduction <add>, %13, %cst_7 [1] : vector<8x16xf32> to vector<8xf32>
    %17 = vector.shape_cast %16 : vector<8xf32> to vector<8x1xf32>
    %18 = arith.addf %15, %17 : vector<8x1xf32>
    %19 = arith.mulf %7, %7 : vector<8x16xf32>
    %cst_8 = arith.constant dense<0.000000e+00> : vector<8xf32>
    %20 = vector.multi_reduction <add>, %19, %cst_8 [1] : vector<8x16xf32> to vector<8xf32>
    %21 = vector.shape_cast %20 : vector<8xf32> to vector<8x1xf32>
    %22 = arith.mulf %13, %13 : vector<8x16xf32>
    %cst_9 = arith.constant dense<0.000000e+00> : vector<8xf32>
    %23 = vector.multi_reduction <add>, %22, %cst_9 [1] : vector<8x16xf32> to vector<8xf32>
    %24 = vector.shape_cast %23 : vector<8xf32> to vector<8x1xf32>
    %25 = arith.addf %21, %24 : vector<8x1xf32>
    %c0_10 = arith.constant 0 : index
    %c0_11 = arith.constant 0 : index
    %26 = vector.load %arg3[%c0_10, %c0_11] : memref<8x2xf32, #tpu.memory_space<vmem>>, vector<8x2xf32>
    %27 = tpu.concatenate %18, %25 in 1 : vector<8x1xf32>, vector<8x1xf32> -> vector<8x2xf32>
    %28 = arith.addf %26, %27 : vector<8x2xf32>
    %c0_12 = arith.constant 0 : index
    %c0_13 = arith.constant 0 : index
    %29 = vector.load %arg3[%c0_12, %c0_13] : memref<8x2xf32, #tpu.memory_space<vmem>>, vector<8x2xf32>
    tpu.vector_store %arg3[%c0_12, %c0_13], %28 {strides = array<i32>} : memref<8x2xf32, #tpu.memory_space<vmem>>, vector<8x2xf32>,
    return
  }
  func.func @transform_0(%arg0: i32) -> (i32, i32, i32) {
    %c0_i32 = arith.constant 0 : i32
    %c0_i32_0 = arith.constant 0 : i32
    %c0_i32_1 = arith.constant 0 : i32
    return %arg0, %c0_i32, %c0_i32_0 : i32, i32, i32
  }
  func.func @transform_1(%arg0: i32) -> (i32, i32) {
    %c0_i32 = arith.constant 0 : i32
    %c0_i32_0 = arith.constant 0 : i32
    %c0_i32_1 = arith.constant 0 : i32
    return %c0_i32, %c0_i32_0 : i32, i32
  }
  func.func @transform_2(%arg0: i32) -> (i32, i32) {
    %c0_i32 = arith.constant 0 : i32
    %c0_i32_0 = arith.constant 0 : i32
    %c0_i32_1 = arith.constant 0 : i32
    return %c0_i32, %c0_i32_0 : i32, i32
  }
}

</mosaic_0001>

<llo_original>
// kernel: tpu_custom_call.1
$region0: #{tpu_custom_call.1}
  #allocation0 [shape = 'u32[]', space=smem, size = 0x4, offset = 0x4, fixed_abs, tag = 'smem constant byte address 0x4 - core index']
  #allocation1 [shape = 'u32[72,128]{1,0:T(1,128)}', space=vmem, size = 0x9000, scoped, tag = 'internal scratch']
  %s0 = inlined_call_operand.vmem [shape: bf16[2,4,16], index: 0, kind: input, shape index: {}]
  %s1 = inlined_call_operand.vmem [shape: bf16[24,4], index: 1, kind: input, shape index: {}]
  %s2 = inlined_call_operand.vmem [shape: f32[8,2], index: 2, kind: output, shape index: {}]
  %s3 = sld [smem:[#allocation0]]
  $region45: #{tpu_custom_call.1} parent=0
    _
  %s5 = ssub.s32 1, %s3
  %s6 = scalar_select 0, %s5, %s3
  loop: start=0, step=1, limit=4
  $region2: #{tpu_custom_call.1} parent=0 // loop_pre_header
    _
  $region3: #{tpu_custom_call.1} parent=0 // loop_header
    %s8 = sphi 0, %s12
    %p9 = scmp.ge.s32.totalorder %s8, 4
    %s18 = sphi 0, %s20
    %s21 = sphi 0, %s18
    %s22 = sphi 0, %s21
    %s38 = sphi 0, %s22
    %s42 = sphi 0, %s42
    %s44 = sphi 0, %s42
    %s45 = sphi 0, %s44
    %s59 = sphi 0, %s45
    %s63 = sphi 0, %s63
    %s65 = sphi 0, %s63
    %s66 = sphi 0, %s65
    %s80 = sphi 0, %s66
  $region4: #{tpu_custom_call.1} parent=0 // loop_header_branch
    %11 = sbr.rel (%p9) target = $region8
  $region5: #{tpu_custom_call.1} parent=0 // loop_body
    %s13 = ssub.s32 %s8, 1
    %s14 = ssub.s32 %s8, 2
    %s15 = sadd.s32 %s8, 1
    %s16 = ssub.s32 %s8, %s15
    %p17 = scmp.eq.s32.totalorder %s16, 0
    %s19 = sadd.s32 %s18, 1
    %s20 = scalar_select %p17, %s18, %s19
    %p23 = pneg %p17
    %p24 = scmp.eq.s32.totalorder %s8, 1
    %p25 = por %p23, %p24
    %p26 = scmp.ne.s32.totalorder %s18, %s21
    %p27 = scmp.eq.s32.totalorder %s8, 0
    %p28 = por %p26, %p27
    %p29 = scmp.ne.s32.totalorder %s18, %s21
    %p30 = scmp.eq.s32.totalorder %s13, 1
    %p31 = por %p29, %p30
    %p32 = scmp.ne.s32.totalorder %s21, %s22
    %p33 = scmp.eq.s32.totalorder %s13, 0
    %p34 = por %p32, %p33
    %p35 = scmp.ne.s32.totalorder %s21, %s22
    %p36 = scmp.eq.s32.totalorder %s14, 1
    %p37 = por %p35, %p36
    %p39 = scmp.ne.s32.totalorder %s22, %s38
    %p40 = scmp.eq.s32.totalorder %s14, 0
    %p41 = por %p39, %p40
    %s43 = sadd.s32 %s42, 1
    %p46 = scmp.eq.s32.totalorder %s8, 1
    %p47 = scmp.ne.s32.totalorder %s42, %s44
    %p48 = scmp.eq.s32.totalorder %s8, 0
    %p49 = por %p47, %p48
    %p50 = scmp.ne.s32.totalorder %s42, %s44
    %p51 = scmp.eq.s32.totalorder %s13, 1
    %p52 = por %p50, %p51
    %p53 = scmp.ne.s32.totalorder %s44, %s45
    %p54 = scmp.eq.s32.totalorder %s13, 0
    %p55 = por %p53, %p54
    %p56 = scmp.ne.s32.totalorder %s44, %s45
    %p57 = scmp.eq.s32.totalorder %s14, 1
    %p58 = por %p56, %p57
    %p60 = scmp.ne.s32.totalorder %s45, %s59
    %p61 = scmp.eq.s32.totalorder %s14, 0
    %p62 = por %p60, %p61
    %s64 = sadd.s32 %s63, 1
    %p67 = scmp.eq.s32.totalorder %s8, 1
    %p68 = scmp.ne.s32.totalorder %s63, %s65
    %p69 = scmp.eq.s32.totalorder %s8, 0
    %p70 = por %p68, %p69
    %p71 = scmp.ne.s32.totalorder %s63, %s65
    %p72 = scmp.eq.s32.totalorder %s13, 1
    %p73 = por %p71, %p72
    %p74 = scmp.ne.s32.totalorder %s65, %s66
    %p75 = scmp.eq.s32.totalorder %s13, 0
    %p76 = por %p74, %p75
    %p77 = scmp.ne.s32.totalorder %s65, %s66
    %p78 = scmp.eq.s32.totalorder %s14, 1
    %p79 = por %p77, %p78
    %p81 = scmp.ne.s32.totalorder %s66, %s80
    %p82 = scmp.eq.s32.totalorder %s14, 0
    %p83 = por %p81, %p82
    %p84 = scmp.le.s32.totalorder 1, %s8
    %p85 = scmp.lt.s32.totalorder %s8, 3
    %p86 = pnand %p84, %p85
    %p87 = pneg %p86
    // Predicated region
    $region9: #{tpu_custom_call.1} parent=5 // pred_check
      _
    $region10: #{tpu_custom_call.1} parent=5 // pred_check_branch
      %89 = sbr.rel (%p86) target = $region12
    $region11: #{tpu_custom_call.1} parent=5 // pred_region
      %s90 = ssub.s32 %s8, 1
      // Predicated region
      $region13: #{tpu_custom_call.1} parent=11 // pred_check
        %p91 = pneg %p55
      $region14: #{tpu_custom_call.1} parent=11 // pred_check_branch
        %93 = sbr.rel (%p91) target = $region16
      $region15: #{tpu_custom_call.1} parent=11 // pred_region
        _
      $region16: #{tpu_custom_call.1} parent=11 // pred_fallthru
        _
    $region12: #{tpu_custom_call.1} parent=5 // pred_fallthru
      _
    %p94 = scmp.lt.s32.totalorder %s8, 2
    // Predicated region
    $region17: #{tpu_custom_call.1} parent=5 // pred_check
      %p95 = pneg %p94
    $region18: #{tpu_custom_call.1} parent=5 // pred_check_branch
      %97 = sbr.rel (%p95) target = $region20
    $region19: #{tpu_custom_call.1} parent=5 // pred_region
      // Predicated region
      $region21: #{tpu_custom_call.1} parent=19 // pred_check
        %p98 = pneg %p28
      $region22: #{tpu_custom_call.1} parent=19 // pred_check_branch
        %100 = sbr.rel (%p98) target = $region24
      $region23: #{tpu_custom_call.1} parent=19 // pred_region
        %p101 = scmp.lt.s32.totalorder %s8, 1
        %s102 = scalar_select %p101, %s8, 1
        %s103 = smul.addr %s102, 2
        %s104 = scalar_lea.vmem %s0, %s103
      $region24: #{tpu_custom_call.1} parent=19 // pred_fallthru
        _
    $region20: #{tpu_custom_call.1} parent=5 // pred_fallthru
      _
    %p105 = scmp.le.s32.totalorder 1, %s8
    %p106 = scmp.lt.s32.totalorder %s8, 3
    %p107 = pnand %p105, %p106
    %p108 = pneg %p107
    // Predicated region
    $region25: #{tpu_custom_call.1} parent=5 // pred_check
      _
    $region26: #{tpu_custom_call.1} parent=5 // pred_check_branch
      %110 = sbr.rel (%p107) target = $region28
    $region27: #{tpu_custom_call.1} parent=5 // pred_region
      %s111 = ssub.s32 %s8, 1
      %p112 = scmp.lt.s32.totalorder %s13, 1
      %s113 = scalar_select %p112, %s13, 1
      %s114 = smul.addr %s113, 2
      %s115 = scalar_lea.vmem %s0, %s114
      %p116 = pneg %p34
      %p117 = pneg %p31
      %p118 = pneg %p55
      %p119 = pneg %p52
      %p120 = pneg %p76
      %p121 = pneg %p73
      %p122 = scmp.lt.s32.totalorder %s13, 1
      %s123 = scalar_select %p122, %s13, 1
      %s124 = smul.addr %s123, 2
      %s125 = scalar_lea.vmem %s0, %s124
      %p127 = scmp.eq.s32.totalorder %s13, 0
      // Predicated region
      $region29: #{tpu_custom_call.1} parent=27 // pred_check
        %p128 = pneg %p127
      $region30: #{tpu_custom_call.1} parent=27 // pred_check_branch
        %130 = sbr.rel (%p128) target = $region32
      $region31: #{tpu_custom_call.1} parent=27 // pred_region
        %vm131 = vcmask 15360
        %132 = vst.msk [vmem:[%s2] sm:$0xff] %vm131, 0.0
      $region32: #{tpu_custom_call.1} parent=27 // pred_fallthru
        _
      %v133 = vld [vmem:[%s125] sm:$0x3]
      %v134 = vld [vmem:[%s1] sm:$0xf]
      %v135 = vld [vmem:[%s1 + $0x4] sm:$0xf]
      %v136 = vld [vmem:[%s1 + $0x8] sm:$0xf]
      %v140 = vunpack.c.l.b16 %v134
      %v141 = vunpack.c.l.b16 %v135
      %v142 = vunpack.c.l.b16 %v136
      %v143 = vpack.c.b16 %v141, %v140
      %v144 = vpack.c.b16 %v142, %v142
      %vm145 = vcmask 31744
      %v147 = vsel %vm145, %v143, 0
      %v150 = vsel %vm145, %v144, 0
      %vm152 = vcmask 1041408
      %v154 = vsel %vm152, %v133, 0
      %156 = vmatpush.bf16.msra.mxu0 0
      %157 = vmatpush.bf16.msra.mxu0 0
      %158 = vmatpush.bf16.msra.mxu0 0
      %159 = vmatpush.bf16.msra.mxu0 0
      %160 = vmatpush.bf16.msra.mxu0 0
      %161 = vmatpush.bf16.msra.mxu0 0
      %162 = vmatpush.bf16.msra.mxu0 0
      %163 = vmatpush.bf16.msra.mxu0 %v154
      %164 = vmatmul.bf16.gmra.mxu0 %v147
      %v165 = vpop.f32.mrf.mxu0
      %v166 = vadd.f32 0.0, %v165
      %v167 = vpop.f32.mrf.mxu0
      %v168 = vadd.f32 0.0, %v167
      %169 = vmatmul.bf16.gmra.mxu0 %v150
      %v170 = vpop.f32.mrf.mxu0
      %v171 = vadd.f32 0.0, %v170
      %v172 = vpop.f32.mrf.mxu0
      %173 = vdwg.mxu0
      %175 = vrot.lane.b32.xlu0 %v171, 127
      %v176 = vpop.permute.xlu0 %175
      %vm178 = vcmask 121856
      %v179 = vsel %vm178, %v176, 0.0
      %v180 = vadd.f32 %v168, %v179
      %vm181 = vcmask 130048
      %v182 = vsel %vm181, %v166, 0.0
      %183 = vadd.xlane.f32.xlu0 %v182
      %v184 = vpop.xlane.xlu0 %183
      %v185 = vsel %vm181, %v180, 0.0
      %186 = vadd.xlane.f32.xlu0 %v185
      %v187 = vpop.xlane.xlu0 %186
      %v188 = vadd.f32 %v184, %v187
      %v189 = vmul.f32 %v166, %v166
      %v190 = vsel %vm181, %v189, 0.0
      %191 = vadd.xlane.f32.xlu0 %v190
      %v192 = vpop.xlane.xlu0 %191
      %v193 = vmul.f32 %v180, %v180
      %v194 = vsel %vm181, %v193, 0.0
      %195 = vadd.xlane.f32.xlu0 %v194
      %v196 = vpop.xlane.xlu0 %195
      %v197 = vadd.f32 %v192, %v196
      %v198 = vld [vmem:[%s2] sm:$0xff]
      %vm199 = vcmask 7168
      %v200 = vsel %vm199, %v188, %v197
      %v201 = vadd.f32 %v198, %v200
      %vm202 = vcmask 15360
      %203 = vst.msk [vmem:[%s2] sm:$0xff] %vm202, %v201
      // Predicated region
      $region33: #{tpu_custom_call.1} parent=27 // pred_check
        %p204 = pneg %p73
      $region34: #{tpu_custom_call.1} parent=27 // pred_check_branch
        %206 = sbr.rel (%p204) target = $region36
      $region35: #{tpu_custom_call.1} parent=27 // pred_region
        _
      $region36: #{tpu_custom_call.1} parent=27 // pred_fallthru
        _
      // Predicated region
      $region37: #{tpu_custom_call.1} parent=27 // pred_check
        %p207 = pneg %p73
      $region38: #{tpu_custom_call.1} parent=27 // pred_check_branch
        %209 = sbr.rel (%p207) target = $region40
      $region39: #{tpu_custom_call.1} parent=27 // pred_region
        _
      $region40: #{tpu_custom_call.1} parent=27 // pred_fallthru
        _
    $region28: #{tpu_custom_call.1} parent=5 // pred_fallthru
      _
    %p210 = scmp.le.s32.totalorder 2, %s8
    // Predicated region
    $region41: #{tpu_custom_call.1} parent=5 // pred_check
      %p211 = pneg %p210
    $region42: #{tpu_custom_call.1} parent=5 // pred_check_branch
      %213 = sbr.rel (%p211) target = $region44
    $region43: #{tpu_custom_call.1} parent=5 // pred_region
      %s214 = ssub.s32 %s8, 2
    $region44: #{tpu_custom_call.1} parent=5 // pred_fallthru
      _
  $region6: #{tpu_custom_call.1} parent=0 // loop_footer
    %s12 = sadd.s32 1, %s8
  $region7: #{tpu_custom_call.1} parent=0 // loop_footer_branch
    %7 = sbr.rel target = $region3
  $region8: #{tpu_custom_call.1} parent=0 // loop_exit
    _

</llo_original>
